<compile_context>
chip_gen: v7x
topology: tpu7x:2x2x1
jax: 0.10.0
libtpu: 0.0.40
codegen_flags: <defaults>
</compile_context>

<pallas_src>
import functools

import jax
import jax.numpy as jnp
from jax.experimental import pallas as pl
from jax.experimental.pallas import tpu as pltpu


LANE = 128       # lane width: feature-dim padding target (weights/outputs)
SUBLANE = 8      # sublane width: batch-tile padding target


def _round_up(x, m):
    return ((x + m - 1) // m) * m


def _pad2d(a, rows, cols):
    """Zero-pad a 2-D array up to (rows, cols)."""
    pr = rows - a.shape[0]
    pc = cols - a.shape[1]
    if pr == 0 and pc == 0:
        return a
    return jnp.pad(a, ((0, pr), (0, pc)))


def mlp_kernel(x_ref,
               w1_ref, b1_ref,
               w2_ref, b2_ref,
               w3_ref, b3_ref,
               w4_ref, b4_ref,
               o_ref):
    """Fused 4-layer MLP for one batch tile. Weights are VMEM-resident."""
    cdt = w1_ref.dtype                      # compute dtype for the MXU (bf16)
    x = x_ref[...].astype(cdt)

    # fc1 + ReLU  (f32 accumulation on the MXU, bias add + ReLU in f32)
    h = jnp.dot(x, w1_ref[...], preferred_element_type=jnp.float32) + b1_ref[...]
    h = jnp.maximum(h, 0.0)

    # fc2 + ReLU
    h = jnp.dot(h.astype(cdt), w2_ref[...],
                preferred_element_type=jnp.float32) + b2_ref[...]
    h = jnp.maximum(h, 0.0)

    # fc3 + ReLU
    h = jnp.dot(h.astype(cdt), w3_ref[...],
                preferred_element_type=jnp.float32) + b3_ref[...]
    h = jnp.maximum(h, 0.0)

    # fc4 (no activation)
    out = jnp.dot(h.astype(cdt), w4_ref[...],
                  preferred_element_type=jnp.float32) + b4_ref[...]

    o_ref[...] = out.astype(o_ref.dtype)


def prepare_params(params, compute_dtype=jnp.bfloat16):
    """Pad params to lane-dense widths ONCE and cast weights to compute dtype.

    Zero-padding is numerically inert: padded weight rows/cols and bias lanes
    are zero, so padded lanes carry exact zeros through every ReLU and never
    contribute to real outputs.  Call this once at init; do NOT call per step.
    Use compute_dtype=jnp.float32 if exact f32 parity with PyTorch is needed.
    """
    in_f = params["w1"].shape[0]
    hidden = params["w1"].shape[1]
    num_classes = params["w4"].shape[1]
    h_p = _round_up(hidden, LANE)
    c_p = _round_up(num_classes, LANE)

    def padw(w, rows, cols):
        return _pad2d(w, rows, cols).astype(compute_dtype)

    def padb(b, cols):
        return _pad2d(b, 1, cols).astype(jnp.float32)

    return {
        "w1": padw(params["w1"], in_f, h_p), "b1": padb(params["b1"], h_p),
        "w2": padw(params["w2"], h_p, h_p), "b2": padb(params["b2"], h_p),
        "w3": padw(params["w3"], h_p, h_p), "b3": padb(params["b3"], h_p),
        "w4": padw(params["w4"], h_p, c_p), "b4": padb(params["b4"], c_p),
    }


@functools.partial(jax.jit, static_argnames=("num_classes", "tb"))
def mlp_forward(x, padded_params, *, num_classes, tb=256):
    """x: [B, input_size] float32.  padded_params: output of prepare_params."""
    B, in_f = x.shape
    p = padded_params
    assert p["w1"].shape[0] == in_f, "x feature dim must match w1 rows"
    h_p = p["w1"].shape[1]
    c_p = p["w4"].shape[1]

    # ---- Batch tiling -------------------------------------------------------
    # Tile must be a multiple of 8 sublanes regardless of user-supplied tb.
    B_sub = _round_up(B, SUBLANE)
    TB = min(_round_up(tb, SUBLANE), B_sub)
    # Keep >= 2 grid steps when the batch allows it so v7x's two TensorCores
    # both get work via the "parallel" batch axis.
    if TB >= B_sub and B_sub >= 2 * SUBLANE:
        TB = _round_up(pl.cdiv(B_sub, 2), SUBLANE)
    grid_b = pl.cdiv(B_sub, TB)
    B_p = grid_b * TB

    # Only the batch dim of x is padded, and only when needed.
    xp = x if B_p == B else jnp.pad(x, ((0, B_p - B), (0, 0)))

    # ---- Specs --------------------------------------------------------------
    # x / out tiles move with the grid (double-buffered by the pipeline).
    # x's last block dim equals the full array dim, so no 128-padding needed.
    x_spec = pl.BlockSpec((TB, in_f), lambda i: (i, 0))
    out_spec = pl.BlockSpec((TB, c_p), lambda i: (i, 0))
    # Weights/biases: whole array placed in VMEM once, single-buffered
    # (no per-step re-DMA, no pipeline double-buffering).
    resident_spec = pl.BlockSpec(memory_space=pltpu.MemorySpace.VMEM)

    weight_args = (p["w1"], p["b1"], p["w2"], p["b2"],
                   p["w3"], p["b3"], p["w4"], p["b4"])
    weight_bytes = sum(int(a.size) * a.dtype.itemsize for a in weight_args)

    # ---- Cost estimate + VMEM budget ---------------------------------------
    flops = 2 * B_p * (in_f * h_p + 2 * h_p * h_p + h_p * c_p)
    bytes_accessed = (B_p * in_f * x.dtype.itemsize
                      + weight_bytes
                      + B_p * c_p * 4)
    cost = pl.CostEstimate(flops=flops, transcendentals=0,
                           bytes_accessed=bytes_accessed)

    # 2x double-buffered x/out tiles + 1x resident weights + f32 intermediates,
    # with generous headroom; floor 32 MiB (covers v5e's 16 MiB scoped default),
    # cap 64 MiB (v7x physical VMEM).
    act_bytes = 2 * TB * in_f * x.dtype.itemsize + 2 * TB * c_p * 4
    inter_bytes = 2 * TB * h_p * 4
    vmem_limit = int(min(64 << 20,
                         max(32 << 20,
                             2 * (weight_bytes + act_bytes + inter_bytes))))

    out_padded = pl.pallas_call(
        mlp_kernel,
        out_shape=jax.ShapeDtypeStruct((B_p, c_p), x.dtype),
        grid=(grid_b,),
        in_specs=[x_spec] + [resident_spec] * len(weight_args),
        out_specs=out_spec,
        compiler_params=pltpu.CompilerParams(
            dimension_semantics=("parallel",),
            vmem_limit_bytes=vmem_limit,
        ),
        cost_estimate=cost,
    )(xp, *weight_args)

    return out_padded[:B, :num_classes]


def init_params(key, input_size, hidden_size, num_classes):
    """Deterministic parameter init (matches nn.Linear shapes, transposed)."""
    ks = jax.random.split(key, 8)

    def linear(kw, kb, fan_in, fan_out):
        bound = 1.0 / jnp.sqrt(fan_in)
        w = jax.random.uniform(kw, (fan_in, fan_out), jnp.float32, -bound, bound)
        b = jax.random.uniform(kb, (1, fan_out), jnp.float32, -bound, bound)
        return w, b

    w1, b1 = linear(ks[0], ks[1], input_size, hidden_size)
    w2, b2 = linear(ks[2], ks[3], hidden_size, hidden_size)
    w3, b3 = linear(ks[4], ks[5], hidden_size, hidden_size)
    w4, b4 = linear(ks[6], ks[7], hidden_size, num_classes)
    return {"w1": w1, "b1": b1, "w2": w2, "b2": b2,
            "w3": w3, "b3": b3, "w4": w4, "b4": b4}


def mlp_reference(x, p, compute_dtype=jnp.float32):
    """Pure-JAX reference. compute_dtype mirrors the kernel's matmul dtype."""
    def layer(h, w, b, relu):
        y = jnp.dot(h.astype(compute_dtype), w.astype(compute_dtype),
                    preferred_element_type=jnp.float32) + b
        return jnp.maximum(y, 0.0) if relu else y

    h = layer(x, p["w1"], p["b1"], True)
    h = layer(h, p["w2"], p["b2"], True)
    h = layer(h, p["w3"], p["b3"], True)
    return layer(h, p["w4"], p["b4"], False)


if __name__ == "__main__":
    batch = 16
    input_size = 32
    hidden_size = 64
    num_classes = 16

    key = jax.random.PRNGKey(0)
    kx, kp = jax.random.split(key)

    x = jax.random.normal(kx, (batch, input_size), jnp.float32)
    params = init_params(kp, input_size, hidden_size, num_classes)
    padded_params = prepare_params(params)            # pad + cast ONCE at init

    out = mlp_forward(x, padded_params, num_classes=num_classes)
    out = jax.block_until_ready(out)

    ref_matched = mlp_reference(x, params, compute_dtype=jnp.bfloat16)
    ref_f32 = mlp_reference(x, params, compute_dtype=jnp.float32)

    assert out.shape == (batch, num_classes)
    # Tight check against a reference using the same bf16-input / f32-accum math.
    assert jnp.allclose(out, ref_matched, atol=2e-3, rtol=2e-3), (
        float(jnp.max(jnp.abs(out - ref_matched))))
    # Loose check against the full-f32 PyTorch-equivalent reference.
    assert jnp.allclose(out, ref_f32, atol=1e-1, rtol=1e-1), (
        float(jnp.max(jnp.abs(out - ref_f32))))

    print("KERNEL_OK")
</pallas_src>

<mosaic_0001>
module attributes {stable_mosaic.version = 11 : i64} {
  func.func @mlp_kernel(%arg0: i32, %arg1: memref<8x32xf32, #tpu.memory_space<vmem>>, %arg2: memref<32x128xbf16, #tpu.memory_space<vmem>>, %arg3: memref<1x128xf32, #tpu.memory_space<vmem>>, %arg4: memref<128x128xbf16, #tpu.memory_space<vmem>>, %arg5: memref<1x128xf32, #tpu.memory_space<vmem>>, %arg6: memref<128x128xbf16, #tpu.memory_space<vmem>>, %arg7: memref<1x128xf32, #tpu.memory_space<vmem>>, %arg8: memref<128x128xbf16, #tpu.memory_space<vmem>>, %arg9: memref<1x128xf32, #tpu.memory_space<vmem>>, %arg10: memref<8x128xf32, #tpu.memory_space<vmem>>) attributes {dimension_semantics = [#tpu.dimension_semantics<parallel>], iteration_bounds = array<i64: 2>, scalar_prefetch = 0 : i64, scratch_operands = 0 : i64, tpu.core_type = #tpu.core_type<tc>, window_params = [{transform_indices = @transform_0, window_bounds = array<i64: 8, 32>}, {pipeline_mode = #tpu.pipeline_mode<synchronous>, transform_indices = @transform_1, window_bounds = array<i64: 32, 128>}, {pipeline_mode = #tpu.pipeline_mode<synchronous>, transform_indices = @transform_2, window_bounds = array<i64: 1, 128>}, {pipeline_mode = #tpu.pipeline_mode<synchronous>, transform_indices = @transform_3, window_bounds = array<i64: 128, 128>}, {pipeline_mode = #tpu.pipeline_mode<synchronous>, transform_indices = @transform_4, window_bounds = array<i64: 1, 128>}, {pipeline_mode = #tpu.pipeline_mode<synchronous>, transform_indices = @transform_5, window_bounds = array<i64: 128, 128>}, {pipeline_mode = #tpu.pipeline_mode<synchronous>, transform_indices = @transform_6, window_bounds = array<i64: 1, 128>}, {pipeline_mode = #tpu.pipeline_mode<synchronous>, transform_indices = @transform_7, window_bounds = array<i64: 128, 128>}, {pipeline_mode = #tpu.pipeline_mode<synchronous>, transform_indices = @transform_8, window_bounds = array<i64: 1, 128>}, {transform_indices = @transform_9, window_bounds = array<i64: 8, 128>}]} {
    %c0 = arith.constant 0 : index
    %c0_0 = arith.constant 0 : index
    %0 = vector.load %arg1[%c0, %c0_0] : memref<8x32xf32, #tpu.memory_space<vmem>>, vector<8x32xf32>
    %1 = arith.truncf %0 : vector<8x32xf32> to vector<8x32xbf16>
    %c0_1 = arith.constant 0 : index
    %c0_2 = arith.constant 0 : index
    %2 = vector.load %arg2[%c0_1, %c0_2] : memref<32x128xbf16, #tpu.memory_space<vmem>>, vector<32x128xbf16>
    %cst = arith.constant dense<0.000000e+00> : vector<8x128xf32>
    %3 = tpu.matmul %1, %2, %cst {dimension_numbers = #tpu.dot_dimension_numbers<[1], [0], [0], [1], [0, 0, 1, 1], [], []>} : vector<8x32xbf16>, vector<32x128xbf16>, vector<8x128xf32> -> vector<8x128xf32>
    %c0_3 = arith.constant 0 : index
    %c0_4 = arith.constant 0 : index
    %4 = vector.load %arg3[%c0_3, %c0_4] : memref<1x128xf32, #tpu.memory_space<vmem>>, vector<1x128xf32>
    %5 = vector.broadcast %4 : vector<1x128xf32> to vector<8x128xf32>
    %6 = arith.addf %3, %5 : vector<8x128xf32>
    %cst_5 = arith.constant 0.000000e+00 : f32
    %7 = vector.broadcast %cst_5 : f32 to vector<8x128xf32>
    %8 = arith.maximumf %6, %7 : vector<8x128xf32>
    %9 = arith.truncf %8 : vector<8x128xf32> to vector<8x128xbf16>
    %c0_6 = arith.constant 0 : index
    %c0_7 = arith.constant 0 : index
    %10 = vector.load %arg4[%c0_6, %c0_7] : memref<128x128xbf16, #tpu.memory_space<vmem>>, vector<128x128xbf16>
    %cst_8 = arith.constant dense<0.000000e+00> : vector<8x128xf32>
    %11 = tpu.matmul %9, %10, %cst_8 {dimension_numbers = #tpu.dot_dimension_numbers<[1], [0], [0], [1], [0, 0, 1, 1], [], []>} : vector<8x128xbf16>, vector<128x128xbf16>, vector<8x128xf32> -> vector<8x128xf32>
    %c0_9 = arith.constant 0 : index
    %c0_10 = arith.constant 0 : index
    %12 = vector.load %arg5[%c0_9, %c0_10] : memref<1x128xf32, #tpu.memory_space<vmem>>, vector<1x128xf32>
    %13 = vector.broadcast %12 : vector<1x128xf32> to vector<8x128xf32>
    %14 = arith.addf %11, %13 : vector<8x128xf32>
    %cst_11 = arith.constant 0.000000e+00 : f32
    %15 = vector.broadcast %cst_11 : f32 to vector<8x128xf32>
    %16 = arith.maximumf %14, %15 : vector<8x128xf32>
    %17 = arith.truncf %16 : vector<8x128xf32> to vector<8x128xbf16>
    %c0_12 = arith.constant 0 : index
    %c0_13 = arith.constant 0 : index
    %18 = vector.load %arg6[%c0_12, %c0_13] : memref<128x128xbf16, #tpu.memory_space<vmem>>, vector<128x128xbf16>
    %cst_14 = arith.constant dense<0.000000e+00> : vector<8x128xf32>
    %19 = tpu.matmul %17, %18, %cst_14 {dimension_numbers = #tpu.dot_dimension_numbers<[1], [0], [0], [1], [0, 0, 1, 1], [], []>} : vector<8x128xbf16>, vector<128x128xbf16>, vector<8x128xf32> -> vector<8x128xf32>
    %c0_15 = arith.constant 0 : index
    %c0_16 = arith.constant 0 : index
    %20 = vector.load %arg7[%c0_15, %c0_16] : memref<1x128xf32, #tpu.memory_space<vmem>>, vector<1x128xf32>
    %21 = vector.broadcast %20 : vector<1x128xf32> to vector<8x128xf32>
    %22 = arith.addf %19, %21 : vector<8x128xf32>
    %cst_17 = arith.constant 0.000000e+00 : f32
    %23 = vector.broadcast %cst_17 : f32 to vector<8x128xf32>
    %24 = arith.maximumf %22, %23 : vector<8x128xf32>
    %25 = arith.truncf %24 : vector<8x128xf32> to vector<8x128xbf16>
    %c0_18 = arith.constant 0 : index
    %c0_19 = arith.constant 0 : index
    %26 = vector.load %arg8[%c0_18, %c0_19] : memref<128x128xbf16, #tpu.memory_space<vmem>>, vector<128x128xbf16>
    %cst_20 = arith.constant dense<0.000000e+00> : vector<8x128xf32>
    %27 = tpu.matmul %25, %26, %cst_20 {dimension_numbers = #tpu.dot_dimension_numbers<[1], [0], [0], [1], [0, 0, 1, 1], [], []>} : vector<8x128xbf16>, vector<128x128xbf16>, vector<8x128xf32> -> vector<8x128xf32>
    %c0_21 = arith.constant 0 : index
    %c0_22 = arith.constant 0 : index
    %28 = vector.load %arg9[%c0_21, %c0_22] : memref<1x128xf32, #tpu.memory_space<vmem>>, vector<1x128xf32>
    %29 = vector.broadcast %28 : vector<1x128xf32> to vector<8x128xf32>
    %30 = arith.addf %27, %29 : vector<8x128xf32>
    %c0_23 = arith.constant 0 : index
    %c0_24 = arith.constant 0 : index
    %31 = vector.load %arg10[%c0_23, %c0_24] : memref<8x128xf32, #tpu.memory_space<vmem>>, vector<8x128xf32>
    tpu.vector_store %arg10[%c0_23, %c0_24], %30 {strides = array<i32>} : memref<8x128xf32, #tpu.memory_space<vmem>>, vector<8x128xf32>,
    return
  }
  func.func @transform_0(%arg0: i32) -> (i32, i32) {
    %c0_i32 = arith.constant 0 : i32
    %c0_i32_0 = arith.constant 0 : i32
    return %arg0, %c0_i32 : i32, i32
  }
  func.func @transform_1(%arg0: i32) -> (i32, i32) {
    %c0_i32 = arith.constant 0 : i32
    %c0_i32_0 = arith.constant 0 : i32
    %c0_i32_1 = arith.constant 0 : i32
    return %c0_i32, %c0_i32_0 : i32, i32
  }
  func.func @transform_2(%arg0: i32) -> (i32, i32) {
    %c0_i32 = arith.constant 0 : i32
    %c0_i32_0 = arith.constant 0 : i32
    %c0_i32_1 = arith.constant 0 : i32
    return %c0_i32, %c0_i32_0 : i32, i32
  }
  func.func @transform_3(%arg0: i32) -> (i32, i32) {
    %c0_i32 = arith.constant 0 : i32
    %c0_i32_0 = arith.constant 0 : i32
    %c0_i32_1 = arith.constant 0 : i32
    return %c0_i32, %c0_i32_0 : i32, i32
  }
  func.func @transform_4(%arg0: i32) -> (i32, i32) {
    %c0_i32 = arith.constant 0 : i32
    %c0_i32_0 = arith.constant 0 : i32
    %c0_i32_1 = arith.constant 0 : i32
    return %c0_i32, %c0_i32_0 : i32, i32
  }
  func.func @transform_5(%arg0: i32) -> (i32, i32) {
    %c0_i32 = arith.constant 0 : i32
    %c0_i32_0 = arith.constant 0 : i32
    %c0_i32_1 = arith.constant 0 : i32
    return %c0_i32, %c0_i32_0 : i32, i32
  }
  func.func @transform_6(%arg0: i32) -> (i32, i32) {
    %c0_i32 = arith.constant 0 : i32
    %c0_i32_0 = arith.constant 0 : i32
    %c0_i32_1 = arith.constant 0 : i32
    return %c0_i32, %c0_i32_0 : i32, i32
  }
  func.func @transform_7(%arg0: i32) -> (i32, i32) {
    %c0_i32 = arith.constant 0 : i32
    %c0_i32_0 = arith.constant 0 : i32
    %c0_i32_1 = arith.constant 0 : i32
    return %c0_i32, %c0_i32_0 : i32, i32
  }
  func.func @transform_8(%arg0: i32) -> (i32, i32) {
    %c0_i32 = arith.constant 0 : i32
    %c0_i32_0 = arith.constant 0 : i32
    %c0_i32_1 = arith.constant 0 : i32
    return %c0_i32, %c0_i32_0 : i32, i32
  }
  func.func @transform_9(%arg0: i32) -> (i32, i32) {
    %c0_i32 = arith.constant 0 : i32
    %c0_i32_0 = arith.constant 0 : i32
    return %arg0, %c0_i32 : i32, i32
  }
}

</mosaic_0001>

<llo_original>
// kernel: mlp_forward.1
$region0: #{mlp_forward.1}
  #allocation0 [shape = 'u32[]', space=smem, size = 0x4, offset = 0x4, fixed_abs, tag = 'smem constant byte address 0x4 - core index']
  #allocation1 [shape = 'u32[144,128]{1,0:T(1,128)}', space=vmem, size = 0x12000, scoped, tag = 'internal scratch']
  %s0 = inlined_call_operand.hbm [shape: f32[16,32], index: 0, kind: input, shape index: {}]
  %s1 = inlined_call_operand.vmem [shape: bf16[32,128], index: 1, kind: input, shape index: {}]
  %s2 = inlined_call_operand.vmem [shape: f32[1,128], index: 2, kind: input, shape index: {}]
  %s3 = inlined_call_operand.hbm [shape: bf16[128,128], index: 3, kind: input, shape index: {}]
  %s4 = inlined_call_operand.vmem [shape: f32[1,128], index: 4, kind: input, shape index: {}]
  %s5 = inlined_call_operand.hbm [shape: bf16[128,128], index: 5, kind: input, shape index: {}]
  %s6 = inlined_call_operand.hbm [shape: f32[1,128], index: 6, kind: input, shape index: {}]
  %s7 = inlined_call_operand.hbm [shape: bf16[128,128], index: 7, kind: input, shape index: {}]
  %s8 = inlined_call_operand.hbm [shape: f32[1,128], index: 8, kind: input, shape index: {}]
  %s9 = inlined_call_operand.hbm [shape: f32[16,128], index: 9, kind: output, shape index: {}]
  %s10 = sld [smem:[#allocation0]]
  $region93: #{mlp_forward.1} parent=0
    _
  %s12 = ssub.s32 1, %s10
  %s13 = scalar_select 0, %s12, %s10
  $region1: #{mlp_forward.1} parent=0
    #allocation2 [shape = 'u8[8192]{0}', space=vmem, size = 0x2000, scoped, tag = 'input window, operand 0']
    #allocation3 [shape = 's32[2]{0}', space=sflag, size = 0x8, scoped, tag = 'scoped memory for mlp_forward.1']
    #allocation4 [shape = 's32[2]{0}', space=sflag, size = 0x8, scoped, tag = 'scoped memory for mlp_forward.1']
    #allocation5 [shape = 'u8[32768]{0}', space=vmem, size = 0x8000, scoped, tag = 'input window, operand 3, single buffered']
    #allocation6 [shape = 's32[1]{0}', space=sflag, size = 0x4, scoped, tag = 'scoped memory for mlp_forward.1']
    #allocation7 [shape = 'u8[32768]{0}', space=vmem, size = 0x8000, scoped, tag = 'input window, operand 5, single buffered']
    #allocation8 [shape = 'u8[512]{0}', space=vmem, size = 0x400, scoped, tag = 'input window, operand 6, single buffered']
    #allocation9 [shape = 's32[1]{0}', space=sflag, size = 0x4, scoped, tag = 'scoped memory for mlp_forward.1']
    #allocation10 [shape = 'u8[32768]{0}', space=vmem, size = 0x8000, scoped, tag = 'input window, operand 7, single buffered']
    #allocation11 [shape = 'u8[512]{0}', space=vmem, size = 0x400, scoped, tag = 'input window, operand 8, single buffered']
    #allocation12 [shape = 's32[1]{0}', space=sflag, size = 0x4, scoped, tag = 'scoped memory for mlp_forward.1']
    #allocation13 [shape = 'u8[8192]{0}', space=vmem, size = 0x2000, scoped, tag = 'output window, operand 0']
    %14 = vsyncpa [#allocation3], 0
    %s15 = scalar_lea.sflag [#allocation3], 1
    %16 = vsyncpa %s15, 0
    %17 = vsyncpa [#allocation6], 0
    %18 = vsyncpa [#allocation9], 0
    %19 = vsyncpa [#allocation12], 0
    %20 = vsyncpa [#allocation4], 0
    %s21 = scalar_lea.sflag [#allocation4], 1
    %22 = vsyncpa %s21, 0
    loop: start=0, step=1, limit=4
    $region2: #{mlp_forward.1} parent=1 // loop_pre_header
      _
    $region3: #{mlp_forward.1} parent=1 // loop_header
      %s24 = sphi 0, %s28
      %p25 = scmp.ge.s32.totalorder %s24, 4
      %s34 = sphi 0, %s36
      %s37 = sphi 0, %s34
      %s38 = sphi 0, %s37
      %s54 = sphi 0, %s38
      %s58 = sphi 0, %s58
      %s60 = sphi 0, %s58
      %s61 = sphi 0, %s60
      %s75 = sphi 0, %s61
      %s79 = sphi 0, %s79
      %s81 = sphi 0, %s79
      %s82 = sphi 0, %s81
      %s96 = sphi 0, %s82
      %s100 = sphi 0, %s100
      %s102 = sphi 0, %s100
      %s103 = sphi 0, %s102
      %s117 = sphi 0, %s103
      %s121 = sphi 0, %s121
      %s123 = sphi 0, %s121
      %s124 = sphi 0, %s123
      %s138 = sphi 0, %s124
      %s142 = sphi 0, %s142
      %s144 = sphi 0, %s142
      %s145 = sphi 0, %s144
      %s159 = sphi 0, %s145
      %s163 = sphi 0, %s163
      %s165 = sphi 0, %s163
      %s166 = sphi 0, %s165
      %s180 = sphi 0, %s166
      %s184 = sphi 0, %s184
      %s186 = sphi 0, %s184
      %s187 = sphi 0, %s186
      %s201 = sphi 0, %s187
      %s205 = sphi 0, %s205
      %s207 = sphi 0, %s205
      %s208 = sphi 0, %s207
      %s222 = sphi 0, %s208
      %s228 = sphi 0, %s230
      %s231 = sphi 0, %s228
      %s232 = sphi 0, %s231
      %s248 = sphi 0, %s232
    $region4: #{mlp_forward.1} parent=1 // loop_header_branch
      %27 = sbr.rel (%p25) target = $region8
    $region5: #{mlp_forward.1} parent=1 // loop_body
      %s29 = ssub.s32 %s24, 1
      %s30 = ssub.s32 %s24, 2
      %s31 = sadd.s32 %s24, 1
      %s32 = ssub.s32 %s24, %s31
      %p33 = scmp.eq.s32.totalorder %s32, 0
      %s35 = sadd.s32 %s34, 1
      %s36 = scalar_select %p33, %s34, %s35
      %p39 = pneg %p33
      %p40 = scmp.eq.s32.totalorder %s24, 1
      %p41 = por %p39, %p40
      %p42 = scmp.ne.s32.totalorder %s34, %s37
      %p43 = scmp.eq.s32.totalorder %s24, 0
      %p44 = por %p42, %p43
      %p45 = scmp.ne.s32.totalorder %s34, %s37
      %p46 = scmp.eq.s32.totalorder %s29, 1
      %p47 = por %p45, %p46
      %p48 = scmp.ne.s32.totalorder %s37, %s38
      %p49 = scmp.eq.s32.totalorder %s29, 0
      %p50 = por %p48, %p49
      %p51 = scmp.ne.s32.totalorder %s37, %s38
      %p52 = scmp.eq.s32.totalorder %s30, 1
      %p53 = por %p51, %p52
      %p55 = scmp.ne.s32.totalorder %s38, %s54
      %p56 = scmp.eq.s32.totalorder %s30, 0
      %p57 = por %p55, %p56
      %s59 = sadd.s32 %s58, 1
      %p62 = scmp.eq.s32.totalorder %s24, 1
      %p63 = scmp.ne.s32.totalorder %s58, %s60
      %p64 = scmp.eq.s32.totalorder %s24, 0
      %p65 = por %p63, %p64
      %p66 = scmp.ne.s32.totalorder %s58, %s60
      %p67 = scmp.eq.s32.totalorder %s29, 1
      %p68 = por %p66, %p67
      %p69 = scmp.ne.s32.totalorder %s60, %s61
      %p70 = scmp.eq.s32.totalorder %s29, 0
      %p71 = por %p69, %p70
      %p72 = scmp.ne.s32.totalorder %s60, %s61
      %p73 = scmp.eq.s32.totalorder %s30, 1
      %p74 = por %p72, %p73
      %p76 = scmp.ne.s32.totalorder %s61, %s75
      %p77 = scmp.eq.s32.totalorder %s30, 0
      %p78 = por %p76, %p77
      %s80 = sadd.s32 %s79, 1
      %p83 = scmp.eq.s32.totalorder %s24, 1
      %p84 = scmp.ne.s32.totalorder %s79, %s81
      %p85 = scmp.eq.s32.totalorder %s24, 0
      %p86 = por %p84, %p85
      %p87 = scmp.ne.s32.totalorder %s79, %s81
      %p88 = scmp.eq.s32.totalorder %s29, 1
      %p89 = por %p87, %p88
      %p90 = scmp.ne.s32.totalorder %s81, %s82
      %p91 = scmp.eq.s32.totalorder %s29, 0
      %p92 = por %p90, %p91
      %p93 = scmp.ne.s32.totalorder %s81, %s82
      %p94 = scmp.eq.s32.totalorder %s30, 1
      %p95 = por %p93, %p94
      %p97 = scmp.ne.s32.totalorder %s82, %s96
      %p98 = scmp.eq.s32.totalorder %s30, 0
      %p99 = por %p97, %p98
      %s101 = sadd.s32 %s100, 1
      %p104 = scmp.eq.s32.totalorder %s24, 1
      %p105 = scmp.ne.s32.totalorder %s100, %s102
      %p106 = scmp.eq.s32.totalorder %s24, 0
      %p107 = por %p105, %p106
      %p108 = scmp.ne.s32.totalorder %s100, %s102
      %p109 = scmp.eq.s32.totalorder %s29, 1
      %p110 = por %p108, %p109
      %p111 = scmp.ne.s32.totalorder %s102, %s103
      %p112 = scmp.eq.s32.totalorder %s29, 0
      %p113 = por %p111, %p112
      %p114 = scmp.ne.s32.totalorder %s102, %s103
      %p115 = scmp.eq.s32.totalorder %s30, 1
      %p116 = por %p114, %p115
      %p118 = scmp.ne.s32.totalorder %s103, %s117
      %p119 = scmp.eq.s32.totalorder %s30, 0
      %p120 = por %p118, %p119
      %s122 = sadd.s32 %s121, 1
      %p125 = scmp.eq.s32.totalorder %s24, 1
      %p126 = scmp.ne.s32.totalorder %s121, %s123
      %p127 = scmp.eq.s32.totalorder %s24, 0
      %p128 = por %p126, %p127
      %p129 = scmp.ne.s32.totalorder %s121, %s123
      %p130 = scmp.eq.s32.totalorder %s29, 1
      %p131 = por %p129, %p130
      %p132 = scmp.ne.s32.totalorder %s123, %s124
      %p133 = scmp.eq.s32.totalorder %s29, 0
      %p134 = por %p132, %p133
      %p135 = scmp.ne.s32.totalorder %s123, %s124
      %p136 = scmp.eq.s32.totalorder %s30, 1
      %p137 = por %p135, %p136
      %p139 = scmp.ne.s32.totalorder %s124, %s138
      %p140 = scmp.eq.s32.totalorder %s30, 0
      %p141 = por %p139, %p140
      %s143 = sadd.s32 %s142, 1
      %p146 = scmp.eq.s32.totalorder %s24, 1
      %p147 = scmp.ne.s32.totalorder %s142, %s144
      %p148 = scmp.eq.s32.totalorder %s24, 0
      %p149 = por %p147, %p148
      %p150 = scmp.ne.s32.totalorder %s142, %s144
      %p151 = scmp.eq.s32.totalorder %s29, 1
      %p152 = por %p150, %p151
      %p153 = scmp.ne.s32.totalorder %s144, %s145
      %p154 = scmp.eq.s32.totalorder %s29, 0
      %p155 = por %p153, %p154
      %p156 = scmp.ne.s32.totalorder %s144, %s145
      %p157 = scmp.eq.s32.totalorder %s30, 1
      %p158 = por %p156, %p157
      %p160 = scmp.ne.s32.totalorder %s145, %s159
      %p161 = scmp.eq.s32.totalorder %s30, 0
      %p162 = por %p160, %p161
      %s164 = sadd.s32 %s163, 1
      %p167 = scmp.eq.s32.totalorder %s24, 1
      %p168 = scmp.ne.s32.totalorder %s163, %s165
      %p169 = scmp.eq.s32.totalorder %s24, 0
      %p170 = por %p168, %p169
      %p171 = scmp.ne.s32.totalorder %s163, %s165
      %p172 = scmp.eq.s32.totalorder %s29, 1
      %p173 = por %p171, %p172
      %p174 = scmp.ne.s32.totalorder %s165, %s166
      %p175 = scmp.eq.s32.totalorder %s29, 0
      %p176 = por %p174, %p175
      %p177 = scmp.ne.s32.totalorder %s165, %s166
      %p178 = scmp.eq.s32.totalorder %s30, 1
      %p179 = por %p177, %p178
      %p181 = scmp.ne.s32.totalorder %s166, %s180
      %p182 = scmp.eq.s32.totalorder %s30, 0
      %p183 = por %p181, %p182
      %s185 = sadd.s32 %s184, 1
      %p188 = scmp.eq.s32.totalorder %s24, 1
      %p189 = scmp.ne.s32.totalorder %s184, %s186
      %p190 = scmp.eq.s32.totalorder %s24, 0
      %p191 = por %p189, %p190
      %p192 = scmp.ne.s32.totalorder %s184, %s186
      %p193 = scmp.eq.s32.totalorder %s29, 1
      %p194 = por %p192, %p193
      %p195 = scmp.ne.s32.totalorder %s186, %s187
      %p196 = scmp.eq.s32.totalorder %s29, 0
      %p197 = por %p195, %p196
      %p198 = scmp.ne.s32.totalorder %s186, %s187
      %p199 = scmp.eq.s32.totalorder %s30, 1
      %p200 = por %p198, %p199
      %p202 = scmp.ne.s32.totalorder %s187, %s201
      %p203 = scmp.eq.s32.totalorder %s30, 0
      %p204 = por %p202, %p203
      %s206 = sadd.s32 %s205, 1
      %p209 = scmp.eq.s32.totalorder %s24, 1
      %p210 = scmp.ne.s32.totalorder %s205, %s207
      %p211 = scmp.eq.s32.totalorder %s24, 0
      %p212 = por %p210, %p211
      %p213 = scmp.ne.s32.totalorder %s205, %s207
      %p214 = scmp.eq.s32.totalorder %s29, 1
      %p215 = por %p213, %p214
      %p216 = scmp.ne.s32.totalorder %s207, %s208
      %p217 = scmp.eq.s32.totalorder %s29, 0
      %p218 = por %p216, %p217
      %p219 = scmp.ne.s32.totalorder %s207, %s208
      %p220 = scmp.eq.s32.totalorder %s30, 1
      %p221 = por %p219, %p220
      %p223 = scmp.ne.s32.totalorder %s208, %s222
      %p224 = scmp.eq.s32.totalorder %s30, 0
      %p225 = por %p223, %p224
      %s226 = ssub.s32 %s24, %s31
      %p227 = scmp.eq.s32.totalorder %s226, 0
      %s229 = sadd.s32 %s228, 1
      %s230 = scalar_select %p227, %s228, %s229
      %p233 = pneg %p227
      %p234 = scmp.eq.s32.totalorder %s24, 1
      %p235 = por %p233, %p234
      %p236 = scmp.ne.s32.totalorder %s228, %s231
      %p237 = scmp.eq.s32.totalorder %s24, 0
      %p238 = por %p236, %p237
      %p239 = scmp.ne.s32.totalorder %s228, %s231
      %p240 = scmp.eq.s32.totalorder %s29, 1
      %p241 = por %p239, %p240
      %p242 = scmp.ne.s32.totalorder %s231, %s232
      %p243 = scmp.eq.s32.totalorder %s29, 0
      %p244 = por %p242, %p243
      %p245 = scmp.ne.s32.totalorder %s231, %s232
      %p246 = scmp.eq.s32.totalorder %s30, 1
      %p247 = por %p245, %p246
      %p249 = scmp.ne.s32.totalorder %s232, %s248
      %p250 = scmp.eq.s32.totalorder %s30, 0
      %p251 = por %p249, %p250
      %p252 = scmp.le.s32.totalorder 1, %s24
      %p253 = scmp.lt.s32.totalorder %s24, 3
      %p254 = pnand %p252, %p253
      %p255 = pneg %p254
      // Predicated region
      $region9: #{mlp_forward.1} parent=5 // pred_check
        _
      $region10: #{mlp_forward.1} parent=5 // pred_check_branch
        %257 = sbr.rel (%p254) target = $region12
      $region11: #{mlp_forward.1} parent=5 // pred_region
        %s258 = ssub.s32 %s24, 1
        // Predicated region
        $region13: #{mlp_forward.1} parent=11 // pred_check
          %p259 = pneg %p71
        $region14: #{mlp_forward.1} parent=11 // pred_check_branch
          %261 = sbr.rel (%p259) target = $region16
        $region15: #{mlp_forward.1} parent=11 // pred_region
          _
        $region16: #{mlp_forward.1} parent=11 // pred_fallthru
          _
        // Predicated region
        $region17: #{mlp_forward.1} parent=11 // pred_check
          %p262 = pneg %p92
        $region18: #{mlp_forward.1} parent=11 // pred_check_branch
          %264 = sbr.rel (%p262) target = $region20
        $region19: #{mlp_forward.1} parent=11 // pred_region
          _
        $region20: #{mlp_forward.1} parent=11 // pred_fallthru
          _
        // Predicated region
        $region21: #{mlp_forward.1} parent=11 // pred_check
          %p265 = pneg %p113
        $region22: #{mlp_forward.1} parent=11 // pred_check_branch
          %267 = sbr.rel (%p265) target = $region24
        $region23: #{mlp_forward.1} parent=11 // pred_region
          %s269 = ssub.s32 1024, 1024
          %270 = vsyncadd [#allocation6], %s269
          %s271 = sshll.u32 [#allocation5], 4
          %s272 = int_to_ptr.vmem [resolvable:$true] %s271
          %277 = dma.hbm_to_vmem [thread:$0]  %s3, 1024, %s272, [#allocation6], 64, 64, 4
        $region24: #{mlp_forward.1} parent=11 // pred_fallthru
          _
        // Predicated region
        $region25: #{mlp_forward.1} parent=11 // pred_check
          %p278 = pneg %p134
        $region26: #{mlp_forward.1} parent=11 // pred_check_branch
          %280 = sbr.rel (%p278) target = $region28
        $region27: #{mlp_forward.1} parent=11 // pred_region
          _
        $region28: #{mlp_forward.1} parent=11 // pred_fallthru
          _
        // Predicated region
        $region29: #{mlp_forward.1} parent=11 // pred_check
          %p281 = pneg %p155
        $region30: #{mlp_forward.1} parent=11 // pred_check_branch
          %283 = sbr.rel (%p281) target = $region32
        $region31: #{mlp_forward.1} parent=11 // pred_region
          %s285 = ssub.s32 1024, 1024
          %286 = vsyncadd [#allocation6], %s285
          %s287 = sshll.u32 [#allocation7], 4
          %s288 = int_to_ptr.vmem [resolvable:$true] %s287
          %293 = dma.hbm_to_vmem [thread:$0]  %s5, 1024, %s288, [#allocation6], 64, 64, 4
        $region32: #{mlp_forward.1} parent=11 // pred_fallthru
          _
        // Predicated region
        $region33: #{mlp_forward.1} parent=11 // pred_check
          %p294 = pneg %p176
        $region34: #{mlp_forward.1} parent=11 // pred_check_branch
          %296 = sbr.rel (%p294) target = $region36
        $region35: #{mlp_forward.1} parent=11 // pred_region
          %s298 = ssub.s32 16, 16
          %299 = vsyncadd [#allocation9], %s298
          %s301 = sshll.u32 [#allocation8], 4
          %s302 = int_to_ptr.vmem [resolvable:$true] %s301
          %304 = dma.hbm_to_vmem [thread:$0]  %s6, 16, %s302, [#allocation9]
        $region36: #{mlp_forward.1} parent=11 // pred_fallthru
          _
        // Predicated region
        $region37: #{mlp_forward.1} parent=11 // pred_check
          %p305 = pneg %p197
        $region38: #{mlp_forward.1} parent=11 // pred_check_branch
          %307 = sbr.rel (%p305) target = $region40
        $region39: #{mlp_forward.1} parent=11 // pred_region
          %s309 = ssub.s32 1024, 1024
          %310 = vsyncadd [#allocation9], %s309
          %s311 = sshll.u32 [#allocation10], 4
          %s312 = int_to_ptr.vmem [resolvable:$true] %s311
          %317 = dma.hbm_to_vmem [thread:$0]  %s7, 1024, %s312, [#allocation9], 64, 64, 4
        $region40: #{mlp_forward.1} parent=11 // pred_fallthru
          _
        // Predicated region
        $region41: #{mlp_forward.1} parent=11 // pred_check
          %p318 = pneg %p218
        $region42: #{mlp_forward.1} parent=11 // pred_check_branch
          %320 = sbr.rel (%p318) target = $region44
        $region43: #{mlp_forward.1} parent=11 // pred_region
          %s322 = ssub.s32 16, 16
          %323 = vsyncadd [#allocation12], %s322
          %s325 = sshll.u32 [#allocation11], 4
          %s326 = int_to_ptr.vmem [resolvable:$true] %s325
          %328 = dma.hbm_to_vmem [thread:$0]  %s8, 16, %s326, [#allocation12]
        $region44: #{mlp_forward.1} parent=11 // pred_fallthru
          _
      $region12: #{mlp_forward.1} parent=5 // pred_fallthru
        _
      %p329 = scmp.lt.s32.totalorder %s24, 2
      // Predicated region
      $region45: #{mlp_forward.1} parent=5 // pred_check
        %p330 = pneg %p329
      $region46: #{mlp_forward.1} parent=5 // pred_check_branch
        %332 = sbr.rel (%p330) target = $region48
      $region47: #{mlp_forward.1} parent=5 // pred_region
        // Predicated region
        $region49: #{mlp_forward.1} parent=47 // pred_check
          %p333 = pneg %p44
        $region50: #{mlp_forward.1} parent=47 // pred_check_branch
          %335 = sbr.rel (%p333) target = $region52
        $region51: #{mlp_forward.1} parent=47 // pred_region
          %s336 = sand.u32 %s34, 1
          %s337 = scalar_lea.sflag [#allocation3], %s336
          %s338 = sand.u32 %s34, 1
          %s339 = smul.addr %s338, 8
          %s340 = scalar_lea.vmem [#allocation2], %s339
          %s342 = ssub.s32 128, 128
          %343 = vsyncadd %s337, %s342
          %s344 = smul.addr %s24, 128
          %s345 = scalar_lea.hbm %s0, %s344
          %s347 = sshll.u32 %s340, 4
          %s348 = int_to_ptr.vmem [resolvable:$true] %s347
          %350 = dma.hbm_to_vmem [thread:$0]  %s345, 128, %s348, %s337
        $region52: #{mlp_forward.1} parent=47 // pred_fallthru
          _
      $region48: #{mlp_forward.1} parent=5 // pred_fallthru
        _
      %p351 = scmp.le.s32.totalorder 1, %s24
      %p352 = scmp.lt.s32.totalorder %s24, 3
      %p353 = pnand %p351, %p352
      %p354 = pneg %p353
      // Predicated region
      $region53: #{mlp_forward.1} parent=5 // pred_check
        _
      $region54: #{mlp_forward.1} parent=5 // pred_check_branch
        %356 = sbr.rel (%p353) target = $region56
      $region55: #{mlp_forward.1} parent=5 // pred_region
        %s357 = ssub.s32 %s24, 1
        %s358 = sand.u32 %s37, 1
        %s359 = scalar_lea.sflag [#allocation3], %s358
        %s360 = sand.u32 %s37, 1
        %s361 = smul.addr %s360, 8
        %s362 = scalar_lea.vmem [#allocation2], %s361
        // Predicated region
        $region57: #{mlp_forward.1} parent=55 // pred_check
          %p363 = pneg %p50
        $region58: #{mlp_forward.1} parent=55 // pred_check_branch
          %365 = sbr.rel (%p363) target = $region60
        $region59: #{mlp_forward.1} parent=55 // pred_region
          %366 = dma.done %s359, 128
        $region60: #{mlp_forward.1} parent=55 // pred_fallthru
          _
        // Predicated region
        $region61: #{mlp_forward.1} parent=55 // pred_check
          %p367 = pneg %p113
        $region62: #{mlp_forward.1} parent=55 // pred_check_branch
          %369 = sbr.rel (%p367) target = $region64
        $region63: #{mlp_forward.1} parent=55 // pred_region
          %370 = dma.done [#allocation6], 1024
        $region64: #{mlp_forward.1} parent=55 // pred_fallthru
          _
        // Predicated region
        $region65: #{mlp_forward.1} parent=55 // pred_check
          %p371 = pneg %p155
        $region66: #{mlp_forward.1} parent=55 // pred_check_branch
          %373 = sbr.rel (%p371) target = $region68
        $region67: #{mlp_forward.1} parent=55 // pred_region
          %374 = dma.done [#allocation6], 1024
        $region68: #{mlp_forward.1} parent=55 // pred_fallthru
          _
        // Predicated region
        $region69: #{mlp_forward.1} parent=55 // pred_check
          %p375 = pneg %p176
        $region70: #{mlp_forward.1} parent=55 // pred_check_branch
          %377 = sbr.rel (%p375) target = $region72
        $region71: #{mlp_forward.1} parent=55 // pred_region
          %378 = dma.done [#allocation9], 16
        $region72: #{mlp_forward.1} parent=55 // pred_fallthru
          _
        // Predicated region
        $region73: #{mlp_forward.1} parent=55 // pred_check
          %p379 = pneg %p197
        $region74: #{mlp_forward.1} parent=55 // pred_check_branch
          %381 = sbr.rel (%p379) target = $region76
        $region75: #{mlp_forward.1} parent=55 // pred_region
          %382 = dma.done [#allocation9], 1024
        $region76: #{mlp_forward.1} parent=55 // pred_fallthru
          _
        // Predicated region
        $region77: #{mlp_forward.1} parent=55 // pred_check
          %p383 = pneg %p218
        $region78: #{mlp_forward.1} parent=55 // pred_check_branch
          %385 = sbr.rel (%p383) target = $region80
        $region79: #{mlp_forward.1} parent=55 // pred_region
          %386 = dma.done [#allocation12], 16
        $region80: #{mlp_forward.1} parent=55 // pred_fallthru
          _
        %s387 = sand.u32 %s37, 1
        %s388 = scalar_lea.sflag [#allocation3], %s387
        %s389 = sand.u32 %s37, 1
        %s390 = smul.addr %s389, 8
        %s391 = scalar_lea.vmem [#allocation2], %s390
        %p392 = pneg %p50
        %p393 = pneg %p47
        %p394 = pneg %p71
        %p395 = pneg %p68
        %p396 = pneg %p92
        %p397 = pneg %p89
        %p398 = pneg %p113
        %p399 = pneg %p110
        %p400 = pneg %p134
        %p401 = pneg %p131
        %p402 = pneg %p155
        %p403 = pneg %p152
        %p404 = pneg %p176
        %p405 = pneg %p173
        %p406 = pneg %p197
        %p407 = pneg %p194
        %p408 = pneg %p218
        %p409 = pneg %p215
        %p410 = pneg %p244
        %p411 = pneg %p241
        %s412 = sand.u32 %s231, 1
        %s413 = scalar_lea.sflag [#allocation4], %s412
        %s414 = sand.u32 %s231, 1
        %s415 = smul.addr %s414, 8
        %s416 = scalar_lea.vmem [#allocation13], %s415
        %v418 = vld [vmem:[%s362] sm:$0xff]
        %v419 = vpack.c.bf16 %v418, %v418
        %v420 = vld [vmem:[%s1] sm:$0xf]
        %v421 = vld [vmem:[%s1 + $0x4] sm:$0xf]
        %v422 = vld [vmem:[%s1 + $0x8] sm:$0xf]
        %v423 = vld [vmem:[%s1 + $0xc] sm:$0xf]
        %v424 = vld [vmem:[%s2] sm:$0x1]
        %v426 = vlaneseq
        %v427 = vshrl.u32 %v426, 7
        %v428 = vsub.s32 0, %v427
        %v429 = vrot.slane %v424, %v428
        %v435 = vunpack.c.l.b16 %v420
        %v436 = vunpack.c.l.b16 %v421
        %v437 = vunpack.c.l.b16 %v422
        %v438 = vunpack.c.l.b16 %v423
        %v439 = vpack.c.b16 %v436, %v435
        %v440 = vpack.c.b16 %v438, %v437
        %vm443 = vcmask 261120
        %v445 = vsel %vm443, %v419, 0
        %447 = vmatprep.subr.bf16.mxu0 0
        %448 = vmatpush1.bf16.msra.mxu0 %v439
        %449 = vmatprep.subr.bf16.mxu0 0
        %450 = vmatpush1.bf16.msra.mxu0 %v440
        %451 = vmatprep.subr.bf16.mxu0 0
        %452 = vmatpush1.bf16.msra.mxu0 0
        %453 = vmatprep.subr.bf16.mxu0 0
        %454 = vmatpush1.bf16.msra.mxu0 0
        %455 = vmatprep.subr.bf16.mxu0 0
        %456 = vmatpush1.bf16.msra.mxu0 0
        %457 = vmatprep.subr.bf16.mxu0 0
        %458 = vmatpush1.bf16.msra.mxu0 0
        %459 = vmatprep.subr.bf16.mxu0 0
        %460 = vmatpush1.bf16.msra.mxu0 0
        %461 = vmatprep.subr.bf16.mxu0 0
        %462 = vmatpush1.bf16.msra.mxu0 0
        %463 = vmatprep.subr.bf16.mxu0 0
        %464 = vmatpush1.bf16.msra.mxu0 0
        %465 = vmatprep.subr.bf16.mxu0 0
        %466 = vmatpush1.bf16.msra.mxu0 0
        %467 = vmatprep.subr.bf16.mxu0 0
        %468 = vmatpush1.bf16.msra.mxu0 0
        %469 = vmatprep.subr.bf16.mxu0 0
        %470 = vmatpush1.bf16.msra.mxu0 0
        %471 = vmatprep.subr.bf16.mxu0 0
        %472 = vmatpush1.bf16.msra.mxu0 0
        %473 = vmatprep.subr.bf16.mxu0 0
        %474 = vmatpush1.bf16.msra.mxu0 0
        %475 = vmatprep.subr.bf16.mxu0 0
        %476 = vmatpush1.bf16.msra.mxu0 0
        %477 = vmatprep.subr.bf16.mxu0 0
        %478 = vmatpush1.bf16.msra.mxu0 0
        %479 = vmatprep.mubr.bf16.mxu0 0
        %480 = vmatmul.mubr.bf16.gmra.mrb[0].mxu0 %v445
        %v481 = vpop.f32.mrb[0].mxu0
        %v482 = vadd.f32 %v429, %v481
        %v483 = vpop.f32.mrb[0].mxu0
        %v484 = vpop.f32.mrb[0].mxu0
        %v485 = vpop.f32.mrb[0].mxu0
        %486 = vdwg.mxu0
        %v487 = vmax.f32 %v482, 0.0
        %v488 = vpack.c.bf16 %v487, %v487
        %v489 = vld [vmem:[#allocation5] sm:$0xf]
        %v490 = vld [vmem:[#allocation5 + $0x4] sm:$0xf]
        %v491 = vld [vmem:[#allocation5 + $0x8] sm:$0xf]
        %v492 = vld [vmem:[#allocation5 + $0xc] sm:$0xf]
        %v493 = vld [vmem:[#allocation5 + $0x10] sm:$0xf]
        %v494 = vld [vmem:[#allocation5 + $0x14] sm:$0xf]
        %v495 = vld [vmem:[#allocation5 + $0x18] sm:$0xf]
        %v496 = vld [vmem:[#allocation5 + $0x1c] sm:$0xf]
        %v497 = vld [vmem:[#allocation5 + $0x20] sm:$0xf]
        %v498 = vld [vmem:[#allocation5 + $0x24] sm:$0xf]
        %v499 = vld [vmem:[#allocation5 + $0x28] sm:$0xf]
        %v500 = vld [vmem:[#allocation5 + $0x2c] sm:$0xf]
        %v501 = vld [vmem:[#allocation5 + $0x30] sm:$0xf]
        %v502 = vld [vmem:[#allocation5 + $0x34] sm:$0xf]
        %v503 = vld [vmem:[#allocation5 + $0x38] sm:$0xf]
        %v504 = vld [vmem:[#allocation5 + $0x3c] sm:$0xf]
        %v505 = vld [vmem:[%s4] sm:$0x1]
        %v507 = vlaneseq
        %v508 = vshrl.u32 %v507, 7
        %v509 = vsub.s32 0, %v508
        %v510 = vrot.slane %v505, %v509
        %v528 = vunpack.c.l.b16 %v489
        %v529 = vunpack.c.l.b16 %v490
        %v530 = vunpack.c.l.b16 %v491
        %v531 = vunpack.c.l.b16 %v492
        %v532 = vunpack.c.l.b16 %v493
        %v533 = vunpack.c.l.b16 %v494
        %v534 = vunpack.c.l.b16 %v495
        %v535 = vunpack.c.l.b16 %v496
        %v536 = vunpack.c.l.b16 %v497
        %v537 = vunpack.c.l.b16 %v498
        %v538 = vunpack.c.l.b16 %v499
        %v539 = vunpack.c.l.b16 %v500
        %v540 = vunpack.c.l.b16 %v501
        %v541 = vunpack.c.l.b16 %v502
        %v542 = vunpack.c.l.b16 %v503
        %v543 = vunpack.c.l.b16 %v504
        %v544 = vpack.c.b16 %v529, %v528
        %v545 = vpack.c.b16 %v531, %v530
        %v546 = vpack.c.b16 %v533, %v532
        %v547 = vpack.c.b16 %v535, %v534
        %v548 = vpack.c.b16 %v537, %v536
        %v549 = vpack.c.b16 %v539, %v538
        %v550 = vpack.c.b16 %v541, %v540
        %v551 = vpack.c.b16 %v543, %v542
        %560 = vmatprep.subr.bf16.mxu0 0
        %561 = vmatpush1.bf16.msra.mxu0 %v544
        %562 = vmatprep.subr.bf16.mxu0 0
        %563 = vmatpush1.bf16.msra.mxu0 %v545
        %564 = vmatprep.subr.bf16.mxu0 0
        %565 = vmatpush1.bf16.msra.mxu0 %v546
        %566 = vmatprep.subr.bf16.mxu0 0
        %567 = vmatpush1.bf16.msra.mxu0 %v547
        %568 = vmatprep.subr.bf16.mxu0 0
        %569 = vmatpush1.bf16.msra.mxu0 %v548
        %570 = vmatprep.subr.bf16.mxu0 0
        %571 = vmatpush1.bf16.msra.mxu0 %v549
        %572 = vmatprep.subr.bf16.mxu0 0
        %573 = vmatpush1.bf16.msra.mxu0 %v550
        %574 = vmatprep.subr.bf16.mxu0 0
        %575 = vmatpush1.bf16.msra.mxu0 %v551
        %576 = vmatprep.subr.bf16.mxu0 0
        %577 = vmatpush1.bf16.msra.mxu0 0
        %578 = vmatprep.subr.bf16.mxu0 0
        %579 = vmatpush1.bf16.msra.mxu0 0
        %580 = vmatprep.subr.bf16.mxu0 0
        %581 = vmatpush1.bf16.msra.mxu0 0
        %582 = vmatprep.subr.bf16.mxu0 0
        %583 = vmatpush1.bf16.msra.mxu0 0
        %584 = vmatprep.subr.bf16.mxu0 0
        %585 = vmatpush1.bf16.msra.mxu0 0
        %586 = vmatprep.subr.bf16.mxu0 0
        %587 = vmatpush1.bf16.msra.mxu0 0
        %588 = vmatprep.subr.bf16.mxu0 0
        %589 = vmatpush1.bf16.msra.mxu0 0
        %590 = vmatprep.subr.bf16.mxu0 0
        %591 = vmatpush1.bf16.msra.mxu0 0
        %592 = vmatprep.mubr.bf16.mxu0 0
        %593 = vmatmul.mubr.bf16.gmra.mrb[0].mxu0 %v488
        %v594 = vpop.f32.mrb[0].mxu0
        %v595 = vadd.f32 %v510, %v594
        %v596 = vpop.f32.mrb[0].mxu0
        %v597 = vpop.f32.mrb[0].mxu0
        %v598 = vpop.f32.mrb[0].mxu0
        %599 = vdwg.mxu0
        %v600 = vmax.f32 %v595, 0.0
        %v601 = vpack.c.bf16 %v600, %v600
        %v602 = vld [vmem:[#allocation7] sm:$0xf]
        %v603 = vld [vmem:[#allocation7 + $0x4] sm:$0xf]
        %v604 = vld [vmem:[#allocation7 + $0x8] sm:$0xf]
        %v605 = vld [vmem:[#allocation7 + $0xc] sm:$0xf]
        %v606 = vld [vmem:[#allocation7 + $0x10] sm:$0xf]
        %v607 = vld [vmem:[#allocation7 + $0x14] sm:$0xf]
        %v608 = vld [vmem:[#allocation7 + $0x18] sm:$0xf]
        %v609 = vld [vmem:[#allocation7 + $0x1c] sm:$0xf]
        %v610 = vld [vmem:[#allocation7 + $0x20] sm:$0xf]
        %v611 = vld [vmem:[#allocation7 + $0x24] sm:$0xf]
        %v612 = vld [vmem:[#allocation7 + $0x28] sm:$0xf]
        %v613 = vld [vmem:[#allocation7 + $0x2c] sm:$0xf]
        %v614 = vld [vmem:[#allocation7 + $0x30] sm:$0xf]
        %v615 = vld [vmem:[#allocation7 + $0x34] sm:$0xf]
        %v616 = vld [vmem:[#allocation7 + $0x38] sm:$0xf]
        %v617 = vld [vmem:[#allocation7 + $0x3c] sm:$0xf]
        %v618 = vld [vmem:[#allocation8] sm:$0x1]
        %v620 = vlaneseq
        %v621 = vshrl.u32 %v620, 7
        %v622 = vsub.s32 0, %v621
        %v623 = vrot.slane %v618, %v622
        %v641 = vunpack.c.l.b16 %v602
        %v642 = vunpack.c.l.b16 %v603
        %v643 = vunpack.c.l.b16 %v604
        %v644 = vunpack.c.l.b16 %v605
        %v645 = vunpack.c.l.b16 %v606
        %v646 = vunpack.c.l.b16 %v607
        %v647 = vunpack.c.l.b16 %v608
        %v648 = vunpack.c.l.b16 %v609
        %v649 = vunpack.c.l.b16 %v610
        %v650 = vunpack.c.l.b16 %v611
        %v651 = vunpack.c.l.b16 %v612
        %v652 = vunpack.c.l.b16 %v613
        %v653 = vunpack.c.l.b16 %v614
        %v654 = vunpack.c.l.b16 %v615
        %v655 = vunpack.c.l.b16 %v616
        %v656 = vunpack.c.l.b16 %v617
        %v657 = vpack.c.b16 %v642, %v641
        %v658 = vpack.c.b16 %v644, %v643
        %v659 = vpack.c.b16 %v646, %v645
        %v660 = vpack.c.b16 %v648, %v647
        %v661 = vpack.c.b16 %v650, %v649
        %v662 = vpack.c.b16 %v652, %v651
        %v663 = vpack.c.b16 %v654, %v653
        %v664 = vpack.c.b16 %v656, %v655
        %673 = vmatprep.subr.bf16.mxu0 0
        %674 = vmatpush1.bf16.msra.mxu0 %v657
        %675 = vmatprep.subr.bf16.mxu0 0
        %676 = vmatpush1.bf16.msra.mxu0 %v658
        %677 = vmatprep.subr.bf16.mxu0 0
        %678 = vmatpush1.bf16.msra.mxu0 %v659
        %679 = vmatprep.subr.bf16.mxu0 0
        %680 = vmatpush1.bf16.msra.mxu0 %v660
        %681 = vmatprep.subr.bf16.mxu0 0
        %682 = vmatpush1.bf16.msra.mxu0 %v661
        %683 = vmatprep.subr.bf16.mxu0 0
        %684 = vmatpush1.bf16.msra.mxu0 %v662
        %685 = vmatprep.subr.bf16.mxu0 0
        %686 = vmatpush1.bf16.msra.mxu0 %v663
        %687 = vmatprep.subr.bf16.mxu0 0
        %688 = vmatpush1.bf16.msra.mxu0 %v664
        %689 = vmatprep.subr.bf16.mxu0 0
        %690 = vmatpush1.bf16.msra.mxu0 0
        %691 = vmatprep.subr.bf16.mxu0 0
        %692 = vmatpush1.bf16.msra.mxu0 0
        %693 = vmatprep.subr.bf16.mxu0 0
        %694 = vmatpush1.bf16.msra.mxu0 0
        %695 = vmatprep.subr.bf16.mxu0 0
        %696 = vmatpush1.bf16.msra.mxu0 0
        %697 = vmatprep.subr.bf16.mxu0 0
        %698 = vmatpush1.bf16.msra.mxu0 0
        %699 = vmatprep.subr.bf16.mxu0 0
        %700 = vmatpush1.bf16.msra.mxu0 0
        %701 = vmatprep.subr.bf16.mxu0 0
        %702 = vmatpush1.bf16.msra.mxu0 0
        %703 = vmatprep.subr.bf16.mxu0 0
        %704 = vmatpush1.bf16.msra.mxu0 0
        %705 = vmatprep.mubr.bf16.mxu0 0
        %706 = vmatmul.mubr.bf16.gmra.mrb[0].mxu0 %v601
        %v707 = vpop.f32.mrb[0].mxu0
        %v708 = vadd.f32 %v623, %v707
        %v709 = vpop.f32.mrb[0].mxu0
        %v710 = vpop.f32.mrb[0].mxu0
        %v711 = vpop.f32.mrb[0].mxu0
        %712 = vdwg.mxu0
        %v713 = vmax.f32 %v708, 0.0
        %v714 = vpack.c.bf16 %v713, %v713
        %v715 = vld [vmem:[#allocation10] sm:$0xf]
        %v716 = vld [vmem:[#allocation10 + $0x4] sm:$0xf]
        %v717 = vld [vmem:[#allocation10 + $0x8] sm:$0xf]
        %v718 = vld [vmem:[#allocation10 + $0xc] sm:$0xf]
        %v719 = vld [vmem:[#allocation10 + $0x10] sm:$0xf]
        %v720 = vld [vmem:[#allocation10 + $0x14] sm:$0xf]
        %v721 = vld [vmem:[#allocation10 + $0x18] sm:$0xf]
        %v722 = vld [vmem:[#allocation10 + $0x1c] sm:$0xf]
        %v723 = vld [vmem:[#allocation10 + $0x20] sm:$0xf]
        %v724 = vld [vmem:[#allocation10 + $0x24] sm:$0xf]
        %v725 = vld [vmem:[#allocation10 + $0x28] sm:$0xf]
        %v726 = vld [vmem:[#allocation10 + $0x2c] sm:$0xf]
        %v727 = vld [vmem:[#allocation10 + $0x30] sm:$0xf]
        %v728 = vld [vmem:[#allocation10 + $0x34] sm:$0xf]
        %v729 = vld [vmem:[#allocation10 + $0x38] sm:$0xf]
        %v730 = vld [vmem:[#allocation10 + $0x3c] sm:$0xf]
        %v731 = vld [vmem:[#allocation11] sm:$0x1]
        %v733 = vlaneseq
        %v734 = vshrl.u32 %v733, 7
        %v735 = vsub.s32 0, %v734
        %v736 = vrot.slane %v731, %v735
        %v754 = vunpack.c.l.b16 %v715
        %v755 = vunpack.c.l.b16 %v716
        %v756 = vunpack.c.l.b16 %v717
        %v757 = vunpack.c.l.b16 %v718
        %v758 = vunpack.c.l.b16 %v719
        %v759 = vunpack.c.l.b16 %v720
        %v760 = vunpack.c.l.b16 %v721
        %v761 = vunpack.c.l.b16 %v722
        %v762 = vunpack.c.l.b16 %v723
        %v763 = vunpack.c.l.b16 %v724
        %v764 = vunpack.c.l.b16 %v725
        %v765 = vunpack.c.l.b16 %v726
        %v766 = vunpack.c.l.b16 %v727
        %v767 = vunpack.c.l.b16 %v728
        %v768 = vunpack.c.l.b16 %v729
        %v769 = vunpack.c.l.b16 %v730
        %v770 = vpack.c.b16 %v755, %v754
        %v771 = vpack.c.b16 %v757, %v756
        %v772 = vpack.c.b16 %v759, %v758
        %v773 = vpack.c.b16 %v761, %v760
        %v774 = vpack.c.b16 %v763, %v762
        %v775 = vpack.c.b16 %v765, %v764
        %v776 = vpack.c.b16 %v767, %v766
        %v777 = vpack.c.b16 %v769, %v768
        %786 = vmatprep.subr.bf16.mxu0 0
        %787 = vmatpush1.bf16.msra.mxu0 %v770
        %788 = vmatprep.subr.bf16.mxu0 0
        %789 = vmatpush1.bf16.msra.mxu0 %v771
        %790 = vmatprep.subr.bf16.mxu0 0
        %791 = vmatpush1.bf16.msra.mxu0 %v772
        %792 = vmatprep.subr.bf16.mxu0 0
        %793 = vmatpush1.bf16.msra.mxu0 %v773
        %794 = vmatprep.subr.bf16.mxu0 0
        %795 = vmatpush1.bf16.msra.mxu0 %v774
        %796 = vmatprep.subr.bf16.mxu0 0
        %797 = vmatpush1.bf16.msra.mxu0 %v775
        %798 = vmatprep.subr.bf16.mxu0 0
        %799 = vmatpush1.bf16.msra.mxu0 %v776
        %800 = vmatprep.subr.bf16.mxu0 0
        %801 = vmatpush1.bf16.msra.mxu0 %v777
        %802 = vmatprep.subr.bf16.mxu0 0
        %803 = vmatpush1.bf16.msra.mxu0 0
        %804 = vmatprep.subr.bf16.mxu0 0
        %805 = vmatpush1.bf16.msra.mxu0 0
        %806 = vmatprep.subr.bf16.mxu0 0
        %807 = vmatpush1.bf16.msra.mxu0 0
        %808 = vmatprep.subr.bf16.mxu0 0
        %809 = vmatpush1.bf16.msra.mxu0 0
        %810 = vmatprep.subr.bf16.mxu0 0
        %811 = vmatpush1.bf16.msra.mxu0 0
        %812 = vmatprep.subr.bf16.mxu0 0
        %813 = vmatpush1.bf16.msra.mxu0 0
        %814 = vmatprep.subr.bf16.mxu0 0
        %815 = vmatpush1.bf16.msra.mxu0 0
        %816 = vmatprep.subr.bf16.mxu0 0
        %817 = vmatpush1.bf16.msra.mxu0 0
        %818 = vmatprep.mubr.bf16.mxu0 0
        %819 = vmatmul.mubr.bf16.gmra.mrb[0].mxu0 %v714
        %v820 = vpop.f32.mrb[0].mxu0
        %v821 = vadd.f32 %v736, %v820
        %v822 = vpop.f32.mrb[0].mxu0
        %v823 = vpop.f32.mrb[0].mxu0
        %v824 = vpop.f32.mrb[0].mxu0
        %825 = vdwg.mxu0
        %826 = vst [vmem:[%s416] sm:$0xff] %v821
        %s827 = sand.u32 %s231, 1
        %s828 = scalar_lea.sflag [#allocation4], %s827
        %s829 = sand.u32 %s231, 1
        %s830 = smul.addr %s829, 8
        %s831 = scalar_lea.vmem [#allocation13], %s830
        // Predicated region
        $region81: #{mlp_forward.1} parent=55 // pred_check
          %p832 = pneg %p241
        $region82: #{mlp_forward.1} parent=55 // pred_check_branch
          %834 = sbr.rel (%p832) target = $region84
        $region83: #{mlp_forward.1} parent=55 // pred_region
          %s836 = ssub.s32 128, 128
          %837 = vsyncadd %s828, %s836
          %s838 = smul.addr %s29, 128
          %s839 = scalar_lea.hbm %s9, %s838
          %s841 = sshll.u32 %s831, 4
          %s842 = int_to_ptr.vmem [resolvable:$true] %s841
          %844 = dma.vmem_to_hbm [thread:$0]  %s842, 128, %s839, %s828
        $region84: #{mlp_forward.1} parent=55 // pred_fallthru
          _
      $region56: #{mlp_forward.1} parent=5 // pred_fallthru
        _
      %p845 = scmp.le.s32.totalorder 2, %s24
      // Predicated region
      $region85: #{mlp_forward.1} parent=5 // pred_check
        %p846 = pneg %p845
      $region86: #{mlp_forward.1} parent=5 // pred_check_branch
        %848 = sbr.rel (%p846) target = $region88
      $region87: #{mlp_forward.1} parent=5 // pred_region
        %s849 = ssub.s32 %s24, 2
        // Predicated region
        $region89: #{mlp_forward.1} parent=87 // pred_check
          %p850 = pneg %p247
        $region90: #{mlp_forward.1} parent=87 // pred_check_branch
          %852 = sbr.rel (%p850) target = $region92
        $region91: #{mlp_forward.1} parent=87 // pred_region
          %s853 = sand.u32 %s232, 1
          %s854 = scalar_lea.sflag [#allocation4], %s853
          %s855 = sand.u32 %s232, 1
          %s856 = smul.addr %s855, 8
          %s857 = scalar_lea.vmem [#allocation13], %s856
          %858 = dma.done %s854, 128
        $region92: #{mlp_forward.1} parent=87 // pred_fallthru
          _
      $region88: #{mlp_forward.1} parent=5 // pred_fallthru
        _
    $region6: #{mlp_forward.1} parent=1 // loop_footer
      %s28 = sadd.s32 1, %s24
    $region7: #{mlp_forward.1} parent=1 // loop_footer_branch
      %23 = sbr.rel target = $region3
    $region8: #{mlp_forward.1} parent=1 // loop_exit
      _
    %859 = vsyncpa [#allocation3], 1
    %s860 = scalar_lea.sflag [#allocation3], 1
    %861 = vsyncpa %s860, 1
    %862 = vsyncpa [#allocation6], 1
    %863 = vsyncpa [#allocation9], 1
    %864 = vsyncpa [#allocation12], 1
    %865 = vsyncpa [#allocation4], 1
    %s866 = scalar_lea.sflag [#allocation4], 1
    %867 = vsyncpa %s866, 1

</llo_original>
